<compile_context>
chip_gen: v7x
topology: tpu7x:2x2x1
jax: 0.10.0
libtpu: 0.0.40
codegen_flags: <defaults>
</compile_context>

<pallas_src>
import jax
import jax.numpy as jnp
from jax.experimental import pallas as pl
from jax.experimental.pallas import tpu as pltpu

LANES = 128
TARGET_TILE_BYTES = 4 << 20   # ~4 MiB per input per block
CHUNK_ROWS = 512              # rows per in-kernel compute chunk (bounds live temps)


def _num_tensorcores():
    """Best-effort TensorCore count (2 on v7x-style chips, 1 on v5e/v6e)."""
    try:
        info = pltpu.get_tpu_info()
    except Exception:
        return 1
    for attr in ("num_cores", "core_count", "num_tensorcores",
                 "tensorcore_count", "cores_per_chip"):
        v = getattr(info, attr, None)
        if isinstance(v, int) and v > 0:
            return v
    return 1


def _make_mse_kernel(tile_rows, chunk_rows, rows_full, tiles_per_split, needs_mask):
    """Kernel: accumulate sum((p - g)^2) into an (8, 128) f32 vector accumulator."""
    n_chunks = tile_rows // chunk_rows

    def kernel(p_ref, g_ref, o_ref, acc_ref):
        s = pl.program_id(0)                 # split (possibly core-parallel) axis
        i = pl.program_id(1)                 # reduction axis within the split

        @pl.when(i == 0)
        def _():
            acc_ref[...] = jnp.zeros_like(acc_ref)

        t = s * tiles_per_split + i          # global tile index
        valid = rows_full - t * tile_rows    # valid rows in this tile (<=0 => phantom)

        def accum(mask_rows):
            def chunk_body(c):
                off = pl.multiple_of(c * chunk_rows, chunk_rows)
                p = p_ref[pl.ds(off, chunk_rows), :].astype(jnp.float32)
                g = g_ref[pl.ds(off, chunk_rows), :].astype(jnp.float32)
                d = p - g
                sq = d * d
                if mask_rows is not None:
                    rid = jax.lax.broadcasted_iota(
                        jnp.int32, (chunk_rows, LANES), 0) + off
                    sq = jnp.where(rid < mask_rows, sq, 0.0)
                # (chunk_rows, 128) -> (8, 128): tile-aligned VPU adds only.
                acc_ref[...] += sq.reshape(-1, 8, LANES).sum(axis=0)
            pl.loop(0, n_chunks)(chunk_body)

        if needs_mask:
            # Fast mask-free path for all full tiles; masked path only for the
            # single partial tile and any phantom tiles from the 2-way split.
            @pl.when(valid >= tile_rows)
            def _():
                accum(None)

            @pl.when(valid < tile_rows)
            def _():
                accum(valid)
        else:
            accum(None)

        @pl.when(i == pl.num_programs(1) - 1)
        def _():
            # Emit the raw lane-dense accumulator; wrapper does the tiny final sum.
            o_ref[...] = acc_ref[...]

    return kernel


def mse_loss(pred, gt):
    assert pred.shape == gt.shape, "prediction and ground truth shapes must match"
    # TODO(synk): accumulation is float32; float64 inputs would be downcast
    # (PyTorch MSELoss on float64 would accumulate in float64).
    n = pred.size
    p_flat = pred.reshape(-1)
    g_flat = gt.reshape(-1)

    itemsize = jnp.dtype(pred.dtype).itemsize
    # Sublane tiling multiple: 8 for 4-byte, 16 for 2-byte, 32 for 1-byte dtypes.
    sub_mult = 8 * max(1, 4 // itemsize)

    rows_full = n // LANES
    bulk_elems = rows_full * LANES

    kernel_sum = jnp.float32(0.0)
    ran_kernel = False

    if rows_full >= sub_mult:
        if rows_full >= CHUNK_ROWS:
            chunk_rows = CHUNK_ROWS
            target_rows = max(
                chunk_rows,
                (TARGET_TILE_BYTES // (LANES * itemsize)) // chunk_rows * chunk_rows,
            )
            tile_rows = min(target_rows, rows_full // chunk_rows * chunk_rows)
        else:
            tile_rows = rows_full // sub_mult * sub_mult
            chunk_rows = tile_rows

        num_tiles = pl.cdiv(rows_full, tile_rows)
        splits = 2 if num_tiles >= 2 else 1
        tiles_per_split = pl.cdiv(num_tiles, splits)
        needs_mask = (splits * tiles_per_split * tile_rows) != rows_full
        max_block = num_tiles - 1

        if bulk_elems == n:
            p2 = p_flat.reshape(rows_full, LANES)        # free reshape, no HBM copy
            g2 = g_flat.reshape(rows_full, LANES)
        else:
            # Only when n % 128 != 0 (rare); the sub-128 tail is handled in JAX.
            p2 = p_flat[:bulk_elems].reshape(rows_full, LANES)
            g2 = g_flat[:bulk_elems].reshape(rows_full, LANES)

        tile_bytes = tile_rows * LANES * itemsize
        f32_chunk_bytes = chunk_rows * LANES * 4
        # 2 inputs x 2 pipeline buffers x native tile + chunked f32 temps + headroom.
        vmem_limit = int(min(
            48 << 20,
            max(24 << 20, 2 * 2 * tile_bytes + 8 * f32_chunk_bytes + (4 << 20)),
        ))

        def in_map(s, i):
            # Clamp phantom tiles (from cdiv-splitting) onto the last real block;
            # their contribution is zeroed by the in-kernel row mask.
            return (jnp.minimum(s * tiles_per_split + i, max_block), 0)

        kernel = _make_mse_kernel(tile_rows, chunk_rows, rows_full,
                                  tiles_per_split, needs_mask)

        def run(dim_sems):
            return pl.pallas_call(
                kernel,
                out_shape=jax.ShapeDtypeStruct((splits, 8, LANES), jnp.float32),
                grid_spec=pltpu.PrefetchScalarGridSpec(
                    num_scalar_prefetch=0,
                    grid=(splits, tiles_per_split),
                    in_specs=[
                        pl.BlockSpec((tile_rows, LANES), in_map),
                        pl.BlockSpec((tile_rows, LANES), in_map),
                    ],
                    out_specs=pl.BlockSpec((None, 8, LANES), lambda s, i: (s, 0, 0)),
                    scratch_shapes=[pltpu.VMEM((8, LANES), jnp.float32)],
                ),
                compiler_params=pltpu.CompilerParams(
                    dimension_semantics=dim_sems,
                    vmem_limit_bytes=vmem_limit,
                ),
            )(p2, g2)

        if splits > 1 and _num_tensorcores() > 1:
            # Real 2-TensorCore sharding of the split axis (v7x); fall back to a
            # plain parallel axis if CORE_PARALLEL does not lower on this chip.
            try:
                partials = run((pltpu.CORE_PARALLEL, pltpu.ARBITRARY))
            except Exception:
                partials = run(("parallel", "arbitrary"))
        else:
            partials = run(("parallel", "arbitrary"))

        kernel_sum = jnp.sum(partials)       # 2x(8,128) floats -> free in the wrapper
        ran_kernel = True

    total = kernel_sum
    if (not ran_kernel) or bulk_elems < n:
        # Ragged sub-128 tail (or the whole input if it is tiny): small suffix
        # slice + plain-JAX reduction; exact fold into the final mean.
        start = bulk_elems if ran_kernel else 0
        tp = p_flat[start:].astype(jnp.float32)
        tg = g_flat[start:].astype(jnp.float32)
        total = total + jnp.sum((tp - tg) ** 2)

    return (total / n).astype(jnp.float32)


if __name__ == "__main__":
    key = jax.random.PRNGKey(0)
    k1, k2 = jax.random.split(key)
    # Small NCHW-style prediction/target pair.
    pred = jax.random.normal(k1, (2, 4, 16, 16), dtype=jnp.float32)
    gt = jax.random.normal(k2, (2, 4, 16, 16), dtype=jnp.float32)

    loss = mse_loss(pred, gt)
    jax.block_until_ready(loss)

    # Sanity check against plain-JAX reference.
    ref = jnp.mean((pred - gt) ** 2)
    assert jnp.allclose(loss, ref, rtol=1e-6, atol=1e-6), (loss, ref)

    print("KERNEL_OK")
</pallas_src>

<mosaic_0001>
module attributes {stable_mosaic.version = 11 : i64} {
  func.func @kernel(%arg0: i32, %arg1: i32, %arg2: memref<16x128xf32, #tpu.memory_space<vmem>>, %arg3: memref<16x128xf32, #tpu.memory_space<vmem>>, %arg4: memref<1x8x128xf32, #tpu.memory_space<vmem>>, %arg5: memref<8x128xf32, #tpu.memory_space<vmem>>) attributes {dimension_semantics = [#tpu.dimension_semantics<parallel>, #tpu.dimension_semantics<arbitrary>], iteration_bounds = array<i64: 1, 1>, scalar_prefetch = 0 : i64, scratch_operands = 1 : i64, tpu.core_type = #tpu.core_type<tc>, window_params = [{transform_indices = @transform_0, window_bounds = array<i64: 16, 128>}, {transform_indices = @transform_1, window_bounds = array<i64: 16, 128>}, {transform_indices = @transform_2, window_bounds = array<i64: 1, 8, 128>}]} {
    %c0_i32 = arith.constant 0 : i32
    %0 = arith.cmpi eq, %arg1, %c0_i32 : i32
    %1 = arith.extui %0 : i1 to i32
    %c0_i32_0 = arith.constant 0 : i32
    %2 = arith.cmpi ne, %1, %c0_i32_0 : i32
    scf.if %2 {
      %cst_11 = arith.constant 0.000000e+00 : f32
      %21 = vector.broadcast %cst_11 : f32 to vector<8x128xf32>
      %c0_12 = arith.constant 0 : index
      %c0_13 = arith.constant 0 : index
      %22 = vector.load %arg5[%c0_12, %c0_13] : memref<8x128xf32, #tpu.memory_space<vmem>>, vector<8x128xf32>
      tpu.vector_store %arg5[%c0_12, %c0_13], %21 {strides = array<i32>} : memref<8x128xf32, #tpu.memory_space<vmem>>, vector<8x128xf32>,
    } else {
    }
    %c0_i32_1 = arith.constant 0 : i32
    %c1_i32 = arith.constant 1 : i32
    %3 = arith.muli %c0_i32_1, %c1_i32 : i32
    %c0_i32_2 = arith.constant 0 : i32
    %4 = arith.addi %c0_i32_2, %3 : i32
    %c16_i32 = arith.constant 16 : i32
    %5 = arith.muli %4, %c16_i32 : i32
    %6 = tpu.assume_multiple %5, 16 : i32
    %7 = arith.index_cast %6 : i32 to index
    %c0 = arith.constant 0 : index
    %8 = vector.load %arg2[%7, %c0] : memref<16x128xf32, #tpu.memory_space<vmem>>, vector<16x128xf32>
    %9 = arith.index_cast %6 : i32 to index
    %c0_3 = arith.constant 0 : index
    %10 = vector.load %arg3[%9, %c0_3] : memref<16x128xf32, #tpu.memory_space<vmem>>, vector<16x128xf32>
    %11 = arith.subf %8, %10 : vector<16x128xf32>
    %12 = arith.mulf %11, %11 : vector<16x128xf32>
    %c0_4 = arith.constant 0 : index
    %c0_5 = arith.constant 0 : index
    %13 = vector.load %arg5[%c0_4, %c0_5] : memref<8x128xf32, #tpu.memory_space<vmem>>, vector<8x128xf32>
    %14 = vector.shape_cast %12 : vector<16x128xf32> to vector<2x8x128xf32>
    %cst = arith.constant dense<0.000000e+00> : vector<8x128xf32>
    %15 = vector.multi_reduction <add>, %14, %cst [0] : vector<2x8x128xf32> to vector<8x128xf32>
    %16 = arith.addf %13, %15 : vector<8x128xf32>
    %c0_6 = arith.constant 0 : index
    %c0_7 = arith.constant 0 : index
    %17 = vector.load %arg5[%c0_6, %c0_7] : memref<8x128xf32, #tpu.memory_space<vmem>>, vector<8x128xf32>
    tpu.vector_store %arg5[%c0_6, %c0_7], %16 {strides = array<i32>} : memref<8x128xf32, #tpu.memory_space<vmem>>, vector<8x128xf32>,
    %c1_i32_8 = arith.constant 1 : i32
    %c0_i32_9 = arith.constant 0 : i32
    %18 = arith.cmpi eq, %arg1, %c0_i32_9 : i32
    %19 = arith.extui %18 : i1 to i32
    %c0_i32_10 = arith.constant 0 : i32
    %20 = arith.cmpi ne, %19, %c0_i32_10 : i32
    scf.if %20 {
      %c0_11 = arith.constant 0 : index
      %c0_12 = arith.constant 0 : index
      %21 = vector.load %arg5[%c0_11, %c0_12] : memref<8x128xf32, #tpu.memory_space<vmem>>, vector<8x128xf32>
      %c0_13 = arith.constant 0 : index
      %c0_14 = arith.constant 0 : index
      %c0_15 = arith.constant 0 : index
      %22 = vector.load %arg4[%c0_13, %c0_14, %c0_15] : memref<1x8x128xf32, #tpu.memory_space<vmem>>, vector<1x8x128xf32>
      %23 = vector.shape_cast %22 : vector<1x8x128xf32> to vector<8x128xf32>
      %24 = vector.shape_cast %21 : vector<8x128xf32> to vector<1x8x128xf32>
      tpu.vector_store %arg4[%c0_13, %c0_14, %c0_15], %24 {strides = array<i32>} : memref<1x8x128xf32, #tpu.memory_space<vmem>>, vector<1x8x128xf32>,
    } else {
    }
    return
  }
  func.func @transform_0(%arg0: i32, %arg1: i32) -> (i32, i32) {
    %c1_i32 = arith.constant 1 : i32
    %0 = arith.muli %arg0, %c1_i32 : i32
    %1 = arith.addi %0, %arg1 : i32
    %c0_i32 = arith.constant 0 : i32
    %2 = arith.minsi %1, %c0_i32 : i32
    %c0_i32_0 = arith.constant 0 : i32
    %c0_i32_1 = arith.constant 0 : i32
    return %2, %c0_i32_0 : i32, i32
  }
  func.func @transform_1(%arg0: i32, %arg1: i32) -> (i32, i32) {
    %c1_i32 = arith.constant 1 : i32
    %0 = arith.muli %arg0, %c1_i32 : i32
    %1 = arith.addi %0, %arg1 : i32
    %c0_i32 = arith.constant 0 : i32
    %2 = arith.minsi %1, %c0_i32 : i32
    %c0_i32_0 = arith.constant 0 : i32
    %c0_i32_1 = arith.constant 0 : i32
    return %2, %c0_i32_0 : i32, i32
  }
  func.func @transform_2(%arg0: i32, %arg1: i32) -> (i32, i32, i32) {
    %c0_i32 = arith.constant 0 : i32
    %c0_i32_0 = arith.constant 0 : i32
    %c0_i32_1 = arith.constant 0 : i32
    return %arg0, %c0_i32, %c0_i32_0 : i32, i32, i32
  }
}

</mosaic_0001>

<llo_original>
// kernel: tpu_custom_call.1
$region0: #{tpu_custom_call.1}
  #allocation0 [shape = 'u32[]', space=smem, size = 0x4, offset = 0x4, fixed_abs, tag = 'smem constant byte address 0x4 - core index']
  #allocation1 [shape = 'u32[144,128]{1,0:T(1,128)}', space=vmem, size = 0x12000, scoped, tag = 'internal scratch']
  #allocation2 [shape = 'f32[8,128]{1,0:T(8,128)}', space=vmem, size = 0x1000, scoped, tag = 'scratch operand']
  %s0 = inlined_call_operand.hbm [shape: f32[16,128], index: 0, kind: input, shape index: {}]
  %s1 = inlined_call_operand.hbm [shape: f32[16,128], index: 1, kind: input, shape index: {}]
  %s2 = inlined_call_operand.hbm [shape: f32[1,8,128], index: 2, kind: output, shape index: {}]
  %s3 = sld [smem:[#allocation0]]
  $region34: #{tpu_custom_call.1} parent=0
    _
  %s5 = ssub.s32 1, %s3
  %s6 = scalar_select 0, %s5, %s3
  $region1: #{tpu_custom_call.1} parent=0
    #allocation3 [shape = 'u8[8192]{0}', space=vmem, size = 0x2000, scoped, tag = 'input window, operand 0, single buffered']
    #allocation4 [shape = 's32[1]{0}', space=sflag, size = 0x4, scoped, tag = 'scoped memory for tpu_custom_call.1']
    #allocation5 [shape = 's32[1]{0}', space=sflag, size = 0x4, scoped, tag = 'scoped memory for tpu_custom_call.1']
    #allocation6 [shape = 'u8[8192]{0}', space=vmem, size = 0x2000, scoped, tag = 'input window, operand 1, single buffered']
    #allocation7 [shape = 's32[1]{0}', space=sflag, size = 0x4, scoped, tag = 'scoped memory for tpu_custom_call.1']
    #allocation8 [shape = 'u8[4096]{0}', space=vmem, size = 0x1000, scoped, tag = 'output window, operand 0, single buffered']
    %7 = vsyncpa [#allocation4], 0
    %8 = vsyncpa [#allocation7], 0
    %9 = vsyncpa [#allocation5], 0
    // Predicated region
    $region2: #{tpu_custom_call.1} parent=1 // pred_check
      _
    $region3: #{tpu_custom_call.1} parent=1 // pred_check_branch
      %11 = sbr.rel (0) target = $region5
    $region4: #{tpu_custom_call.1} parent=1 // pred_region
      %s12 = sadd.s32 0, 0
      %p13 = scmp.lt.s32.totalorder %s12, 0
      %s14 = scalar_select %p13, %s12, 0
      %s15 = smul.u32 2, %s14
      %s17 = ssub.s32 256, 256
      %18 = vsyncadd [#allocation4], %s17
      %s19 = smul.addr %s15, 128
      %s20 = scalar_lea.hbm %s0, %s19
      %s21 = sshll.u32 [#allocation3], 4
      %s22 = int_to_ptr.vmem [resolvable:$true] %s21
      %27 = dma.hbm_to_vmem [thread:$0]  %s20, 256, %s22, [#allocation4], 128, 128, 8
    $region5: #{tpu_custom_call.1} parent=1 // pred_fallthru
      _
    // Predicated region
    $region6: #{tpu_custom_call.1} parent=1 // pred_check
      _
    $region7: #{tpu_custom_call.1} parent=1 // pred_check_branch
      %29 = sbr.rel (0) target = $region9
    $region8: #{tpu_custom_call.1} parent=1 // pred_region
      %s30 = sadd.s32 0, 0
      %p31 = scmp.lt.s32.totalorder %s30, 0
      %s32 = scalar_select %p31, %s30, 0
      %s33 = smul.u32 2, %s32
      %s35 = ssub.s32 256, 256
      %36 = vsyncadd [#allocation7], %s35
      %s37 = smul.addr %s33, 128
      %s38 = scalar_lea.hbm %s1, %s37
      %s39 = sshll.u32 [#allocation6], 4
      %s40 = int_to_ptr.vmem [resolvable:$true] %s39
      %45 = dma.hbm_to_vmem [thread:$0]  %s38, 256, %s40, [#allocation7], 128, 128, 8
    $region9: #{tpu_custom_call.1} parent=1 // pred_fallthru
      _
    // Predicated region
    $region10: #{tpu_custom_call.1} parent=1 // pred_check
      _
    $region11: #{tpu_custom_call.1} parent=1 // pred_check_branch
      %47 = sbr.rel (0) target = $region13
    $region12: #{tpu_custom_call.1} parent=1 // pred_region
      %48 = dma.done [#allocation4], 256
    $region13: #{tpu_custom_call.1} parent=1 // pred_fallthru
      _
    // Predicated region
    $region14: #{tpu_custom_call.1} parent=1 // pred_check
      _
    $region15: #{tpu_custom_call.1} parent=1 // pred_check_branch
      %50 = sbr.rel (0) target = $region17
    $region16: #{tpu_custom_call.1} parent=1 // pred_region
      %51 = dma.done [#allocation7], 256
    $region17: #{tpu_custom_call.1} parent=1 // pred_fallthru
      _
    %s52 = sadd.s32 0, 0
    %p53 = scmp.lt.s32.totalorder %s52, 0
    %s54 = scalar_select %p53, %s52, 0
    %s55 = smul.u32 2, %s54
    %s56 = sadd.s32 0, 0
    %p57 = scmp.lt.s32.totalorder %s56, 0
    %s58 = scalar_select %p57, %s56, 0
    %s59 = smul.u32 2, %s58
    %p60 = scmp.eq.s32.totalorder 0, 0
    // Predicated region
    $region18: #{tpu_custom_call.1} parent=1 // pred_check
      %p61 = pneg %p60
    $region19: #{tpu_custom_call.1} parent=1 // pred_check_branch
      %63 = sbr.rel (%p61) target = $region21
    $region20: #{tpu_custom_call.1} parent=1 // pred_region
      %64 = vst [vmem:[#allocation2] sm:$0xff] 0.0
    $region21: #{tpu_custom_call.1} parent=1 // pred_fallthru
      _
    %v65 = vld [vmem:[#allocation3] sm:$0xff]
    %v66 = vld [vmem:[#allocation3 + $0x8] sm:$0xff]
    %v67 = vld [vmem:[#allocation6] sm:$0xff]
    %v68 = vld [vmem:[#allocation6 + $0x8] sm:$0xff]
    %v69 = vsub.f32 %v65, %v67
    %v70 = vsub.f32 %v66, %v68
    %v71 = vmul.f32 %v69, %v69
    %v72 = vmul.f32 %v70, %v70
    %v73 = vld [vmem:[#allocation2] sm:$0xff]
    %v74 = vadd.f32 %v71, %v72
    %v75 = vadd.f32 %v73, %v74
    %76 = vst [vmem:[#allocation2] sm:$0xff] %v75
    // Predicated region
    $region22: #{tpu_custom_call.1} parent=1 // pred_check
      %p77 = pneg %p60
    $region23: #{tpu_custom_call.1} parent=1 // pred_check_branch
      %79 = sbr.rel (%p77) target = $region25
    $region24: #{tpu_custom_call.1} parent=1 // pred_region
      %v80 = vld [vmem:[#allocation2] sm:$0xff]
      %81 = vst [vmem:[#allocation8] sm:$0xff] %v80
    $region25: #{tpu_custom_call.1} parent=1 // pred_fallthru
      _
    // Predicated region
    $region26: #{tpu_custom_call.1} parent=1 // pred_check
      _
    $region27: #{tpu_custom_call.1} parent=1 // pred_check_branch
      %83 = sbr.rel (0) target = $region29
    $region28: #{tpu_custom_call.1} parent=1 // pred_region
      %s85 = ssub.s32 128, 128
      %86 = vsyncadd [#allocation5], %s85
      %s88 = sshll.u32 [#allocation8], 4
      %s89 = int_to_ptr.vmem [resolvable:$true] %s88
      %91 = dma.vmem_to_hbm [thread:$0]  %s89, 128, %s2, [#allocation5]
    $region29: #{tpu_custom_call.1} parent=1 // pred_fallthru
      _
    // Predicated region
    $region30: #{tpu_custom_call.1} parent=1 // pred_check
      _
    $region31: #{tpu_custom_call.1} parent=1 // pred_check_branch
      %93 = sbr.rel (0) target = $region33
    $region32: #{tpu_custom_call.1} parent=1 // pred_region
      %94 = dma.done [#allocation5], 128
    $region33: #{tpu_custom_call.1} parent=1 // pred_fallthru
      _
    %95 = vsyncpa [#allocation4], 1
    %96 = vsyncpa [#allocation7], 1
    %97 = vsyncpa [#allocation5], 1

</llo_original>
